<compile_context>
chip_gen: v5e
topology: v5e:2x2
jax: 0.10.0
libtpu: 0.0.40
codegen_flags: <defaults>
</compile_context>

<pallas_src>
import functools

import jax
import jax.numpy as jnp
from jax.experimental import pallas as pl
from jax.experimental.pallas import tpu as pltpu


# ----------------------------------------------------------------------------
# Kernel
# ----------------------------------------------------------------------------
def _relu(x):
    return jnp.maximum(x, 0.0)


def _q_kernel(xa_ref, enc_ref, head_ref, out_ref, *, obs_dim, act_dim, d_model):
    in_f = obs_dim + act_dim
    h2 = 2 * d_model
    dm = d_model

    xa = xa_ref[...]  # (TB, in_f)

    # ---- fused (block-diagonal) obs + act encoder ResidualMLPs + ReLU ------
    w_in = enc_ref[0:in_f, :]
    w_h = enc_ref[in_f:in_f + h2, :]
    w_out = enc_ref[in_f + h2:in_f + 2 * h2, :]
    r0 = in_f + 2 * h2
    b_in = enc_ref[r0:r0 + 1, :]
    b_h = enc_ref[r0 + 1:r0 + 2, :]
    b_out = enc_ref[r0 + 2:r0 + 3, :]

    e = jnp.dot(xa, w_in, preferred_element_type=jnp.float32) + b_in
    e = e + _relu(jnp.dot(e, w_h, preferred_element_type=jnp.float32) + b_h)
    e = _relu(jnp.dot(e, w_out, preferred_element_type=jnp.float32) + b_out)  # (TB, 2d)

    # ---- head slab slices ---------------------------------------------------
    w_mlp_in = head_ref[0:dm, :]
    w_mlp_h = head_ref[dm:2 * dm, :]
    w_mlp_out = head_ref[2 * dm:3 * dm, :]
    w_dec_in = head_ref[3 * dm:4 * dm, :]
    w_dec_h = head_ref[4 * dm:5 * dm, :]
    r = 5 * dm
    b_mlp_in = head_ref[r + 0:r + 1, :]
    b_mlp_h = head_ref[r + 1:r + 2, :]
    b_mlp_out = head_ref[r + 2:r + 3, :]
    b_dec_in = head_ref[r + 3:r + 4, :]
    b_dec_h = head_ref[r + 4:r + 5, :]
    w_dec_out = head_ref[r + 5:r + 6, :]   # (1, dm): transposed (dm, 1) matrix
    b_dec_out = head_ref[r + 6:r + 7, :]   # scalar bias in lane 0
    task_emb = head_ref[r + 7:r + 8, :]    # (1, dm) task-embedding row

    # combine the two encoder halves + task embedding
    h = e[:, :dm] + e[:, dm:] + task_emb   # (TB, dm)

    # ---- shared MLP ResidualMLP + ReLU (use_mlp == True) --------------------
    m = jnp.dot(h, w_mlp_in, preferred_element_type=jnp.float32) + b_mlp_in
    m = m + _relu(jnp.dot(m, w_mlp_h, preferred_element_type=jnp.float32) + b_mlp_h)
    m = _relu(jnp.dot(m, w_mlp_out, preferred_element_type=jnp.float32) + b_mlp_out)

    # ---- Q decoder ResidualMLP (d_model -> 1) --------------------------------
    d = jnp.dot(m, w_dec_in, preferred_element_type=jnp.float32) + b_dec_in
    d = d + _relu(jnp.dot(d, w_dec_h, preferred_element_type=jnp.float32) + b_dec_h)
    # final projection to width 1: VPU multiply + lane reduction (no N=1 MXU op)
    q = jnp.sum(d * w_dec_out, axis=-1, keepdims=True) + b_dec_out[:, 0:1]  # (TB, 1)

    # lane-dense (unmasked) store; wrapper slices column 0
    out_ref[...] = jnp.broadcast_to(q, out_ref.shape)


# ----------------------------------------------------------------------------
# Parameter packing (plain-JAX glue, outside the kernel)
# ----------------------------------------------------------------------------
def _block_diag(a, b):
    z_tr = jnp.zeros((a.shape[0], b.shape[1]), jnp.float32)
    z_bl = jnp.zeros((b.shape[0], a.shape[1]), jnp.float32)
    return jnp.concatenate(
        [jnp.concatenate([a, z_tr], axis=1),
         jnp.concatenate([z_bl, b], axis=1)], axis=0)


def _pack_params(obs_p, act_p, mlp_p, dec_p, task_embed_row):
    ow_in, ob_in, ow_h, ob_h, ow_out, ob_out = obs_p
    aw_in, ab_in, aw_h, ab_h, aw_out, ab_out = act_p
    mw_in, mb_in, mw_h, mb_h, mw_out, mb_out = mlp_p
    dw_in, db_in, dw_h, db_h, dw_out, db_out = dec_p

    d_model = ow_in.shape[1]

    # Encoder slab: block-diagonal fusion of obs & act ResidualMLPs, width 2*d.
    enc_slab = jnp.concatenate(
        [_block_diag(ow_in, aw_in),                       # (obs+act, 2d)
         _block_diag(ow_h, aw_h),                         # (2d, 2d)
         _block_diag(ow_out, aw_out),                     # (2d, 2d)
         jnp.concatenate([ob_in, ab_in], axis=1),         # (1, 2d)
         jnp.concatenate([ob_h, ab_h], axis=1),           # (1, 2d)
         jnp.concatenate([ob_out, ab_out], axis=1)],      # (1, 2d)
        axis=0).astype(jnp.float32)

    dw_out_row = dw_out.T                                  # (1, d_model)
    db_out_row = jnp.zeros((1, d_model), jnp.float32).at[0, 0].set(db_out[0, 0])

    # Head slab: shared MLP + decoder weights, all bias rows, task embedding.
    head_slab = jnp.concatenate(
        [mw_in, mw_h, mw_out, dw_in, dw_h,                 # 5 x (d, d)
         mb_in, mb_h, mb_out, db_in, db_h,                 # 5 bias rows
         dw_out_row, db_out_row,                           # decoder out proj
         task_embed_row.reshape(1, d_model)],              # task embedding row
        axis=0).astype(jnp.float32)

    return enc_slab, head_slab


def _round_up(n, m):
    return ((n + m - 1) // m) * m


# ----------------------------------------------------------------------------
# Wrapper
# ----------------------------------------------------------------------------
def specific_continuous_q_forward(x, a, task_embed_row, obs_p, act_p, mlp_p, dec_p):
    """Fused Q-network forward pass. Returns (B, 1) float32."""
    batch, obs_dim = x.shape
    act_dim = a.shape[1]
    d_model = task_embed_row.shape[-1]
    in_f = obs_dim + act_dim

    enc_slab, head_slab = _pack_params(obs_p, act_p, mlp_p, dec_p, task_embed_row)

    xa = jnp.concatenate([x, a], axis=1).astype(jnp.float32)   # (B, obs+act)

    # Batch tiling: pad to the 8-sublane tile; tile at 128 rows for big batches.
    tb = 128 if batch >= 128 else _round_up(batch, 8)
    pb = _round_up(batch, tb)
    if pb != batch:
        xa = jnp.pad(xa, ((0, pb - batch), (0, 0)))

    out_lanes = 128  # lane-dense output slab; column 0 carries q

    kernel = functools.partial(
        _q_kernel, obs_dim=obs_dim, act_dim=act_dim, d_model=d_model)

    out = pl.pallas_call(
        kernel,
        out_shape=jax.ShapeDtypeStruct((pb, out_lanes), jnp.float32),
        grid=(pb // tb,),
        in_specs=[
            pl.BlockSpec((tb, in_f), lambda i: (i, 0)),
            # weights: constant index_map -> single DMA, VMEM-resident
            pl.BlockSpec(enc_slab.shape, lambda i: (0, 0)),
            pl.BlockSpec(head_slab.shape, lambda i: (0, 0)),
        ],
        out_specs=pl.BlockSpec((tb, out_lanes), lambda i: (i, 0)),
        compiler_params=pltpu.CompilerParams(
            dimension_semantics=("parallel",)),
    )(xa, enc_slab, head_slab)

    return out[:batch, 0:1]


# ----------------------------------------------------------------------------
# Deterministic parameter construction + pure-JAX reference
# ----------------------------------------------------------------------------
def _make_residual_mlp_params(key, in_dim, hidden, out_dim):
    ks = jax.random.split(key, 6)
    scale_in = 1.0 / jnp.sqrt(jnp.float32(in_dim))
    scale_h = 1.0 / jnp.sqrt(jnp.float32(hidden))
    w_in = jax.random.normal(ks[0], (in_dim, hidden), jnp.float32) * scale_in
    b_in = jax.random.normal(ks[1], (1, hidden), jnp.float32) * 0.01
    w_h = jax.random.normal(ks[2], (hidden, hidden), jnp.float32) * scale_h
    b_h = jax.random.normal(ks[3], (1, hidden), jnp.float32) * 0.01
    w_out = jax.random.normal(ks[4], (hidden, out_dim), jnp.float32) * scale_h
    b_out = jax.random.normal(ks[5], (1, out_dim), jnp.float32) * 0.01
    return (w_in, b_in, w_h, b_h, w_out, b_out)


def _reference_forward(x, a, task_embed_row, obs_p, act_p, mlp_p, dec_p):
    def rmlp(z, p):
        w_in, b_in, w_h, b_h, w_out, b_out = p
        h = z @ w_in + b_in
        h = h + jnp.maximum(h @ w_h + b_h, 0.0)
        return h @ w_out + b_out

    h = jnp.maximum(rmlp(x, obs_p), 0.0)
    a_h = jnp.maximum(rmlp(a, act_p), 0.0)
    h = h + task_embed_row + a_h
    h = jnp.maximum(rmlp(h, mlp_p), 0.0)
    return rmlp(h, dec_p)


if __name__ == "__main__":
    # Small shapes consistent with the module: flat observation, Box action.
    batch = 2
    obs_dim = 16
    act_dim = 4
    d_model = 32      # cfg.nn.actor_critic.d_model
    n_tasks = 3       # len(env_ids)
    task_id = 0       # self.task_id_int_dict[env_id] (host-side dict lookup)

    root = jax.random.PRNGKey(0)
    k_x, k_a, k_emb, k_obs, k_act, k_mlp, k_dec = jax.random.split(root, 7)

    x = jax.random.normal(k_x, (batch, obs_dim), jnp.float32)
    a = jax.random.normal(k_a, (batch, act_dim), jnp.float32)

    # nn.Embedding(n_tasks, d_model); row lookup is host-side glue.
    task_embedding = jax.random.normal(k_emb, (n_tasks, d_model), jnp.float32)
    task_embed_row = task_embedding[task_id][None, :]  # (1, d_model)

    obs_p = _make_residual_mlp_params(k_obs, obs_dim, d_model, d_model)
    act_p = _make_residual_mlp_params(k_act, act_dim, d_model, d_model)
    mlp_p = _make_residual_mlp_params(k_mlp, d_model, d_model, d_model)
    dec_p = _make_residual_mlp_params(k_dec, d_model, d_model, 1)

    q = specific_continuous_q_forward(x, a, task_embed_row, obs_p, act_p, mlp_p, dec_p)
    q = jax.block_until_ready(q)

    q_ref = _reference_forward(x, a, task_embed_row, obs_p, act_p, mlp_p, dec_p)
    assert q.shape == (batch, 1), q.shape
    assert jnp.allclose(q, q_ref, atol=1e-4, rtol=1e-4), (q, q_ref)

    # TODO(synk): the Resnet (3-D image observation) encoder branch and the
    # nn.ModuleDict per-env dispatch have no in-kernel equivalent; only the
    # flat-observation / Box-action path is implemented here.
    print("KERNEL_OK")
</pallas_src>

<mosaic_0001>
module attributes {stable_mosaic.version = 11 : i64} {
  func.func @_q_kernel(%arg0: i32, %arg1: memref<8x20xf32, #tpu.memory_space<vmem>>, %arg2: memref<151x64xf32, #tpu.memory_space<vmem>>, %arg3: memref<168x32xf32, #tpu.memory_space<vmem>>, %arg4: memref<8x128xf32, #tpu.memory_space<vmem>>) attributes {dimension_semantics = [#tpu.dimension_semantics<parallel>], iteration_bounds = array<i64: 1>, scalar_prefetch = 0 : i64, scratch_operands = 0 : i64, tpu.core_type = #tpu.core_type<tc>, window_params = [{transform_indices = @transform_0, window_bounds = array<i64: 8, 20>}, {pipeline_mode = #tpu.pipeline_mode<synchronous>, transform_indices = @transform_1, window_bounds = array<i64: 151, 64>}, {pipeline_mode = #tpu.pipeline_mode<synchronous>, transform_indices = @transform_2, window_bounds = array<i64: 168, 32>}, {transform_indices = @transform_3, window_bounds = array<i64: 8, 128>}]} {
    %c0 = arith.constant 0 : index
    %c0_0 = arith.constant 0 : index
    %0 = vector.load %arg1[%c0, %c0_0] : memref<8x20xf32, #tpu.memory_space<vmem>>, vector<8x20xf32>
    %c0_1 = arith.constant 0 : index
    %c0_2 = arith.constant 0 : index
    %1 = vector.load %arg2[%c0_1, %c0_2] : memref<151x64xf32, #tpu.memory_space<vmem>>, vector<20x64xf32>
    %c20 = arith.constant 20 : index
    %c0_3 = arith.constant 0 : index
    %2 = vector.load %arg2[%c20, %c0_3] : memref<151x64xf32, #tpu.memory_space<vmem>>, vector<64x64xf32>
    %c84 = arith.constant 84 : index
    %c0_4 = arith.constant 0 : index
    %3 = vector.load %arg2[%c84, %c0_4] : memref<151x64xf32, #tpu.memory_space<vmem>>, vector<64x64xf32>
    %c148 = arith.constant 148 : index
    %c0_5 = arith.constant 0 : index
    %4 = vector.load %arg2[%c148, %c0_5] : memref<151x64xf32, #tpu.memory_space<vmem>>, vector<1x64xf32>
    %c149 = arith.constant 149 : index
    %c0_6 = arith.constant 0 : index
    %5 = vector.load %arg2[%c149, %c0_6] : memref<151x64xf32, #tpu.memory_space<vmem>>, vector<1x64xf32>
    %c150 = arith.constant 150 : index
    %c0_7 = arith.constant 0 : index
    %6 = vector.load %arg2[%c150, %c0_7] : memref<151x64xf32, #tpu.memory_space<vmem>>, vector<1x64xf32>
    %cst = arith.constant dense<0.000000e+00> : vector<8x64xf32>
    %7 = tpu.matmul %0, %1, %cst {dimension_numbers = #tpu.dot_dimension_numbers<[1], [0], [0], [1], [0, 0, 1, 1], [], []>} : vector<8x20xf32>, vector<20x64xf32>, vector<8x64xf32> -> vector<8x64xf32>
    %8 = vector.broadcast %4 : vector<1x64xf32> to vector<8x64xf32>
    %9 = arith.addf %7, %8 : vector<8x64xf32>
    %cst_8 = arith.constant dense<0.000000e+00> : vector<8x64xf32>
    %10 = tpu.matmul %9, %2, %cst_8 {dimension_numbers = #tpu.dot_dimension_numbers<[1], [0], [0], [1], [0, 0, 1, 1], [], []>} : vector<8x64xf32>, vector<64x64xf32>, vector<8x64xf32> -> vector<8x64xf32>
    %11 = vector.broadcast %5 : vector<1x64xf32> to vector<8x64xf32>
    %12 = arith.addf %10, %11 : vector<8x64xf32>
    %cst_9 = arith.constant 0.000000e+00 : f32
    %13 = vector.broadcast %cst_9 : f32 to vector<8x64xf32>
    %14 = arith.maximumf %12, %13 : vector<8x64xf32>
    %15 = arith.addf %9, %14 : vector<8x64xf32>
    %cst_10 = arith.constant dense<0.000000e+00> : vector<8x64xf32>
    %16 = tpu.matmul %15, %3, %cst_10 {dimension_numbers = #tpu.dot_dimension_numbers<[1], [0], [0], [1], [0, 0, 1, 1], [], []>} : vector<8x64xf32>, vector<64x64xf32>, vector<8x64xf32> -> vector<8x64xf32>
    %17 = vector.broadcast %6 : vector<1x64xf32> to vector<8x64xf32>
    %18 = arith.addf %16, %17 : vector<8x64xf32>
    %cst_11 = arith.constant 0.000000e+00 : f32
    %19 = vector.broadcast %cst_11 : f32 to vector<8x64xf32>
    %20 = arith.maximumf %18, %19 : vector<8x64xf32>
    %c0_12 = arith.constant 0 : index
    %c0_13 = arith.constant 0 : index
    %21 = vector.load %arg3[%c0_12, %c0_13] : memref<168x32xf32, #tpu.memory_space<vmem>>, vector<32x32xf32>
    %c32 = arith.constant 32 : index
    %c0_14 = arith.constant 0 : index
    %22 = vector.load %arg3[%c32, %c0_14] : memref<168x32xf32, #tpu.memory_space<vmem>>, vector<32x32xf32>
    %c64 = arith.constant 64 : index
    %c0_15 = arith.constant 0 : index
    %23 = vector.load %arg3[%c64, %c0_15] : memref<168x32xf32, #tpu.memory_space<vmem>>, vector<32x32xf32>
    %c96 = arith.constant 96 : index
    %c0_16 = arith.constant 0 : index
    %24 = vector.load %arg3[%c96, %c0_16] : memref<168x32xf32, #tpu.memory_space<vmem>>, vector<32x32xf32>
    %c128 = arith.constant 128 : index
    %c0_17 = arith.constant 0 : index
    %25 = vector.load %arg3[%c128, %c0_17] : memref<168x32xf32, #tpu.memory_space<vmem>>, vector<32x32xf32>
    %c160 = arith.constant 160 : index
    %c0_18 = arith.constant 0 : index
    %26 = vector.load %arg3[%c160, %c0_18] : memref<168x32xf32, #tpu.memory_space<vmem>>, vector<1x32xf32>
    %c161 = arith.constant 161 : index
    %c0_19 = arith.constant 0 : index
    %27 = vector.load %arg3[%c161, %c0_19] : memref<168x32xf32, #tpu.memory_space<vmem>>, vector<1x32xf32>
    %c162 = arith.constant 162 : index
    %c0_20 = arith.constant 0 : index
    %28 = vector.load %arg3[%c162, %c0_20] : memref<168x32xf32, #tpu.memory_space<vmem>>, vector<1x32xf32>
    %c163 = arith.constant 163 : index
    %c0_21 = arith.constant 0 : index
    %29 = vector.load %arg3[%c163, %c0_21] : memref<168x32xf32, #tpu.memory_space<vmem>>, vector<1x32xf32>
    %c164 = arith.constant 164 : index
    %c0_22 = arith.constant 0 : index
    %30 = vector.load %arg3[%c164, %c0_22] : memref<168x32xf32, #tpu.memory_space<vmem>>, vector<1x32xf32>
    %c165 = arith.constant 165 : index
    %c0_23 = arith.constant 0 : index
    %31 = vector.load %arg3[%c165, %c0_23] : memref<168x32xf32, #tpu.memory_space<vmem>>, vector<1x32xf32>
    %c166 = arith.constant 166 : index
    %c0_24 = arith.constant 0 : index
    %32 = vector.load %arg3[%c166, %c0_24] : memref<168x32xf32, #tpu.memory_space<vmem>>, vector<1x32xf32>
    %c167 = arith.constant 167 : index
    %c0_25 = arith.constant 0 : index
    %33 = vector.load %arg3[%c167, %c0_25] : memref<168x32xf32, #tpu.memory_space<vmem>>, vector<1x32xf32>
    %34 = vector.extract_strided_slice %20 {offsets = [0, 0], sizes = [8, 32], strides = [1, 1]} : vector<8x64xf32> to vector<8x32xf32>
    %35 = vector.extract_strided_slice %20 {offsets = [0, 32], sizes = [8, 32], strides = [1, 1]} : vector<8x64xf32> to vector<8x32xf32>
    %36 = arith.addf %34, %35 : vector<8x32xf32>
    %37 = vector.broadcast %33 : vector<1x32xf32> to vector<8x32xf32>
    %38 = arith.addf %36, %37 : vector<8x32xf32>
    %cst_26 = arith.constant dense<0.000000e+00> : vector<8x32xf32>
    %39 = tpu.matmul %38, %21, %cst_26 {dimension_numbers = #tpu.dot_dimension_numbers<[1], [0], [0], [1], [0, 0, 1, 1], [], []>} : vector<8x32xf32>, vector<32x32xf32>, vector<8x32xf32> -> vector<8x32xf32>
    %40 = vector.broadcast %26 : vector<1x32xf32> to vector<8x32xf32>
    %41 = arith.addf %39, %40 : vector<8x32xf32>
    %cst_27 = arith.constant dense<0.000000e+00> : vector<8x32xf32>
    %42 = tpu.matmul %41, %22, %cst_27 {dimension_numbers = #tpu.dot_dimension_numbers<[1], [0], [0], [1], [0, 0, 1, 1], [], []>} : vector<8x32xf32>, vector<32x32xf32>, vector<8x32xf32> -> vector<8x32xf32>
    %43 = vector.broadcast %27 : vector<1x32xf32> to vector<8x32xf32>
    %44 = arith.addf %42, %43 : vector<8x32xf32>
    %cst_28 = arith.constant 0.000000e+00 : f32
    %45 = vector.broadcast %cst_28 : f32 to vector<8x32xf32>
    %46 = arith.maximumf %44, %45 : vector<8x32xf32>
    %47 = arith.addf %41, %46 : vector<8x32xf32>
    %cst_29 = arith.constant dense<0.000000e+00> : vector<8x32xf32>
    %48 = tpu.matmul %47, %23, %cst_29 {dimension_numbers = #tpu.dot_dimension_numbers<[1], [0], [0], [1], [0, 0, 1, 1], [], []>} : vector<8x32xf32>, vector<32x32xf32>, vector<8x32xf32> -> vector<8x32xf32>
    %49 = vector.broadcast %28 : vector<1x32xf32> to vector<8x32xf32>
    %50 = arith.addf %48, %49 : vector<8x32xf32>
    %cst_30 = arith.constant 0.000000e+00 : f32
    %51 = vector.broadcast %cst_30 : f32 to vector<8x32xf32>
    %52 = arith.maximumf %50, %51 : vector<8x32xf32>
    %cst_31 = arith.constant dense<0.000000e+00> : vector<8x32xf32>
    %53 = tpu.matmul %52, %24, %cst_31 {dimension_numbers = #tpu.dot_dimension_numbers<[1], [0], [0], [1], [0, 0, 1, 1], [], []>} : vector<8x32xf32>, vector<32x32xf32>, vector<8x32xf32> -> vector<8x32xf32>
    %54 = vector.broadcast %29 : vector<1x32xf32> to vector<8x32xf32>
    %55 = arith.addf %53, %54 : vector<8x32xf32>
    %cst_32 = arith.constant dense<0.000000e+00> : vector<8x32xf32>
    %56 = tpu.matmul %55, %25, %cst_32 {dimension_numbers = #tpu.dot_dimension_numbers<[1], [0], [0], [1], [0, 0, 1, 1], [], []>} : vector<8x32xf32>, vector<32x32xf32>, vector<8x32xf32> -> vector<8x32xf32>
    %57 = vector.broadcast %30 : vector<1x32xf32> to vector<8x32xf32>
    %58 = arith.addf %56, %57 : vector<8x32xf32>
    %cst_33 = arith.constant 0.000000e+00 : f32
    %59 = vector.broadcast %cst_33 : f32 to vector<8x32xf32>
    %60 = arith.maximumf %58, %59 : vector<8x32xf32>
    %61 = arith.addf %55, %60 : vector<8x32xf32>
    %62 = vector.broadcast %31 : vector<1x32xf32> to vector<8x32xf32>
    %63 = arith.mulf %61, %62 : vector<8x32xf32>
    %cst_34 = arith.constant dense<0.000000e+00> : vector<8xf32>
    %64 = vector.multi_reduction <add>, %63, %cst_34 [1] : vector<8x32xf32> to vector<8xf32>
    %65 = vector.shape_cast %64 : vector<8xf32> to vector<8x1xf32>
    %66 = vector.extract_strided_slice %32 {offsets = [0, 0], sizes = [1, 1], strides = [1, 1]} : vector<1x32xf32> to vector<1x1xf32>
    %67 = vector.broadcast %66 : vector<1x1xf32> to vector<8x1xf32>
    %68 = arith.addf %65, %67 : vector<8x1xf32>
    %69 = vector.shape_cast %68 : vector<8x1xf32> to vector<8x1xf32>
    %70 = vector.broadcast %69 : vector<8x1xf32> to vector<8x128xf32>
    %c0_35 = arith.constant 0 : index
    %c0_36 = arith.constant 0 : index
    %71 = vector.load %arg4[%c0_35, %c0_36] : memref<8x128xf32, #tpu.memory_space<vmem>>, vector<8x128xf32>
    tpu.vector_store %arg4[%c0_35, %c0_36], %70 {strides = array<i32>} : memref<8x128xf32, #tpu.memory_space<vmem>>, vector<8x128xf32>,
    return
  }
  func.func @transform_0(%arg0: i32) -> (i32, i32) {
    %c0_i32 = arith.constant 0 : i32
    %c0_i32_0 = arith.constant 0 : i32
    return %arg0, %c0_i32 : i32, i32
  }
  func.func @transform_1(%arg0: i32) -> (i32, i32) {
    %c0_i32 = arith.constant 0 : i32
    %c0_i32_0 = arith.constant 0 : i32
    %c0_i32_1 = arith.constant 0 : i32
    return %c0_i32, %c0_i32_0 : i32, i32
  }
  func.func @transform_2(%arg0: i32) -> (i32, i32) {
    %c0_i32 = arith.constant 0 : i32
    %c0_i32_0 = arith.constant 0 : i32
    %c0_i32_1 = arith.constant 0 : i32
    return %c0_i32, %c0_i32_0 : i32, i32
  }
  func.func @transform_3(%arg0: i32) -> (i32, i32) {
    %c0_i32 = arith.constant 0 : i32
    %c0_i32_0 = arith.constant 0 : i32
    return %arg0, %c0_i32 : i32, i32
  }
}

</mosaic_0001>

<llo_original>
// kernel: tpu_custom_call.1
$region0: #{tpu_custom_call.1}
  #allocation0 [shape = 'u32[]', space=smem, size = 0x4, offset = 0x4, fixed_abs, tag = 'smem constant byte address 0x4 - core index']
  #allocation1 [shape = 'u32[72,128]{1,0:T(1,128)}', space=vmem, size = 0x9000, scoped, tag = 'internal scratch']
  %s0 = inlined_call_operand.vmem [shape: f32[8,20], index: 0, kind: input, shape index: {}]
  %s1 = inlined_call_operand.vmem [shape: f32[151,64], index: 1, kind: input, shape index: {}]
  %s2 = inlined_call_operand.vmem [shape: f32[168,32], index: 2, kind: input, shape index: {}]
  %s3 = inlined_call_operand.hbm [shape: f32[8,128], index: 3, kind: output, shape index: {}]
  %s4 = sld [smem:[#allocation0]]
  $region22: #{tpu_custom_call.1} parent=0
    _
  %s6 = ssub.s32 1, %s4
  %s7 = scalar_select 0, %s6, %s4
  $region1: #{tpu_custom_call.1} parent=0
    #allocation2 [shape = 'u8[4096]{0}', space=vmem, size = 0x1000, scoped, tag = 'output window, operand 0, single buffered']
    #allocation3 [shape = 's32[1]{0}', space=sflag, size = 0x4, scoped, tag = 'scoped memory for tpu_custom_call.1']
    %8 = vsyncpa [#allocation3], 0
    // Predicated region
    $region2: #{tpu_custom_call.1} parent=1 // pred_check
      _
    $region3: #{tpu_custom_call.1} parent=1 // pred_check_branch
      %10 = sbr.rel (0) target = $region5
    $region4: #{tpu_custom_call.1} parent=1 // pred_region
      _
    $region5: #{tpu_custom_call.1} parent=1 // pred_fallthru
      _
    // Predicated region
    $region6: #{tpu_custom_call.1} parent=1 // pred_check
      _
    $region7: #{tpu_custom_call.1} parent=1 // pred_check_branch
      %12 = sbr.rel (0) target = $region9
    $region8: #{tpu_custom_call.1} parent=1 // pred_region
      _
    $region9: #{tpu_custom_call.1} parent=1 // pred_fallthru
      _
    // Predicated region
    $region10: #{tpu_custom_call.1} parent=1 // pred_check
      _
    $region11: #{tpu_custom_call.1} parent=1 // pred_check_branch
      %14 = sbr.rel (0) target = $region13
    $region12: #{tpu_custom_call.1} parent=1 // pred_region
      _
    $region13: #{tpu_custom_call.1} parent=1 // pred_fallthru
      _
    %v15 = vld [vmem:[%s0] sm:$0xff]
    %v16 = vld [vmem:[%s1] sm:$0xff]
    %v17 = vld [vmem:[%s1 + $0x8] sm:$0xff]
    %v18 = vld [vmem:[%s1 + $0x10] sm:$0xf]
    %v19 = vld [vmem:[%s1 + $0x14] sm:$0xff]
    %v20 = vld [vmem:[%s1 + $0x1c] sm:$0xff]
    %v21 = vld [vmem:[%s1 + $0x24] sm:$0xff]
    %v22 = vld [vmem:[%s1 + $0x2c] sm:$0xff]
    %v23 = vld [vmem:[%s1 + $0x34] sm:$0xff]
    %v24 = vld [vmem:[%s1 + $0x3c] sm:$0xff]
    %v25 = vld [vmem:[%s1 + $0x44] sm:$0xff]
    %v26 = vld [vmem:[%s1 + $0x4c] sm:$0xff]
    %v27 = vld [vmem:[%s1 + $0x54] sm:$0xff]
    %v28 = vld [vmem:[%s1 + $0x5c] sm:$0xff]
    %v29 = vld [vmem:[%s1 + $0x64] sm:$0xff]
    %v30 = vld [vmem:[%s1 + $0x6c] sm:$0xff]
    %v31 = vld [vmem:[%s1 + $0x74] sm:$0xff]
    %v32 = vld [vmem:[%s1 + $0x7c] sm:$0xff]
    %v33 = vld [vmem:[%s1 + $0x84] sm:$0xff]
    %v34 = vld [vmem:[%s1 + $0x8c] sm:$0xff]
    %v35 = vld [vmem:[%s1 + $0x94] sm:$0x1]
    %v36 = vld [vmem:[%s1 + $0x95] sm:$0x1]
    %v37 = vld [vmem:[%s1 + $0x96] sm:$0x1]
    %v38 = vperm.slane %v35, 0
    %vm39 = vcmask 162816
    %v41 = vsel %vm39, %v15, 0
    %vm43 = vcmask 1043456
    %v45 = vsel %vm43, %v18, 0
    %47 = vmatpush.msra.mxu0 0.0
    %48 = vmatpush.msra.mxu0 0.0
    %49 = vmatpush.msra.mxu0 0.0
    %50 = vmatpush.msra.mxu0 0.0
    %51 = vmatpush.msra.mxu0 0.0
    %52 = vmatpush.msra.mxu0 0.0
    %53 = vmatpush.msra.mxu0 0.0
    %54 = vmatpush.msra.mxu0 0.0
    %55 = vmatpush.msra.mxu0 0.0
    %56 = vmatpush.msra.mxu0 0.0
    %57 = vmatpush.msra.mxu0 0.0
    %58 = vmatpush.msra.mxu0 0.0
    %59 = vmatpush.msra.mxu0 0.0
    %60 = vmatpush.msra.mxu0 %v45
    %61 = vmatpush.msra.mxu0 %v17
    %62 = vmatpush.msra.mxu0 %v16
    %63 = vmatmul.f32.gmra.mxu0 %v41
    %v64 = vpop.f32.mrf.mxu0
    %v65 = vadd.f32 %v38, %v64
    %66 = vdwg.mxu0
    %v67 = vperm.slane %v36, 0
    %vm68 = vcmask 523264
    %v70 = vsel %vm68, %v65, 0
    %72 = vmatpush.msra.mxu0 0.0
    %73 = vmatpush.msra.mxu0 0.0
    %74 = vmatpush.msra.mxu0 0.0
    %75 = vmatpush.msra.mxu0 0.0
    %76 = vmatpush.msra.mxu0 0.0
    %77 = vmatpush.msra.mxu0 0.0
    %78 = vmatpush.msra.mxu0 0.0
    %79 = vmatpush.msra.mxu0 0.0
    %80 = vmatpush.msra.mxu0 %v26
    %81 = vmatpush.msra.mxu0 %v25
    %82 = vmatpush.msra.mxu0 %v24
    %83 = vmatpush.msra.mxu0 %v23
    %84 = vmatpush.msra.mxu0 %v22
    %85 = vmatpush.msra.mxu0 %v21
    %86 = vmatpush.msra.mxu0 %v20
    %87 = vmatpush.msra.mxu0 %v19
    %88 = vmatmul.f32.gmra.mxu0 %v70
    %v89 = vpop.f32.mrf.mxu0
    %v90 = vadd.f32 %v67, %v89
    %91 = vdwg.mxu0
    %v92 = vmax.f32 %v90, 0.0
    %v93 = vadd.f32 %v65, %v92
    %v94 = vperm.slane %v37, 0
    %v96 = vsel %vm68, %v93, 0
    %98 = vmatpush.msra.mxu0 0.0
    %99 = vmatpush.msra.mxu0 0.0
    %100 = vmatpush.msra.mxu0 0.0
    %101 = vmatpush.msra.mxu0 0.0
    %102 = vmatpush.msra.mxu0 0.0
    %103 = vmatpush.msra.mxu0 0.0
    %104 = vmatpush.msra.mxu0 0.0
    %105 = vmatpush.msra.mxu0 0.0
    %106 = vmatpush.msra.mxu0 %v34
    %107 = vmatpush.msra.mxu0 %v33
    %108 = vmatpush.msra.mxu0 %v32
    %109 = vmatpush.msra.mxu0 %v31
    %110 = vmatpush.msra.mxu0 %v30
    %111 = vmatpush.msra.mxu0 %v29
    %112 = vmatpush.msra.mxu0 %v28
    %113 = vmatpush.msra.mxu0 %v27
    %114 = vmatmul.f32.gmra.mxu0 %v96
    %v115 = vpop.f32.mrf.mxu0
    %v116 = vadd.f32 %v94, %v115
    %117 = vdwg.mxu0
    %v118 = vmax.f32 %v116, 0.0
    %v119 = vld [vmem:[%s2] sm:$0xff]
    %v120 = vld [vmem:[%s2 + $0x8] sm:$0xff]
    %v121 = vld [vmem:[%s2 + $0x10] sm:$0xff]
    %v122 = vld [vmem:[%s2 + $0x18] sm:$0xff]
    %v123 = vld [vmem:[%s2 + $0x20] sm:$0xff]
    %v124 = vld [vmem:[%s2 + $0x28] sm:$0xff]
    %v125 = vld [vmem:[%s2 + $0x30] sm:$0xff]
    %v126 = vld [vmem:[%s2 + $0x38] sm:$0xff]
    %v127 = vld [vmem:[%s2 + $0x40] sm:$0xff]
    %v128 = vld [vmem:[%s2 + $0x48] sm:$0xff]
    %v129 = vld [vmem:[%s2 + $0x50] sm:$0xff]
    %v130 = vld [vmem:[%s2 + $0x58] sm:$0xff]
    %v131 = vld [vmem:[%s2 + $0x60] sm:$0xff]
    %v132 = vld [vmem:[%s2 + $0x68] sm:$0xff]
    %v133 = vld [vmem:[%s2 + $0x70] sm:$0xff]
    %v134 = vld [vmem:[%s2 + $0x78] sm:$0xff]
    %v135 = vld [vmem:[%s2 + $0x80] sm:$0xff]
    %v136 = vld [vmem:[%s2 + $0x88] sm:$0xff]
    %v137 = vld [vmem:[%s2 + $0x90] sm:$0xff]
    %v138 = vld [vmem:[%s2 + $0x98] sm:$0xff]
    %v139 = vld [vmem:[%s2 + $0xa0] sm:$0x1]
    %v140 = vld [vmem:[%s2 + $0xa1] sm:$0x1]
    %v141 = vld [vmem:[%s2 + $0xa2] sm:$0x1]
    %v142 = vld [vmem:[%s2 + $0xa3] sm:$0x1]
    %v143 = vld [vmem:[%s2 + $0xa4] sm:$0x1]
    %v144 = vld [vmem:[%s2 + $0xa5] sm:$0x1]
    %v145 = vld [vmem:[%s2 + $0xa6] sm:$0x1]
    %v146 = vld [vmem:[%s2 + $0xa7] sm:$0x1]
    %148 = vrot.lane.b32.xlu0 %v118, 96
    %v149 = vpop.permute.xlu0 %148
    %v151 = vadd.f32 %v118, %v149
    %v152 = vperm.slane %v146, 0
    %v153 = vadd.f32 %v151, %v152
    %v154 = vperm.slane %v139, 0
    %vm155 = vcmask 261120
    %v157 = vsel %vm155, %v153, 0
    %159 = vmatpush.msra.mxu0 0.0
    %160 = vmatpush.msra.mxu0 0.0
    %161 = vmatpush.msra.mxu0 0.0
    %162 = vmatpush.msra.mxu0 0.0
    %163 = vmatpush.msra.mxu0 0.0
    %164 = vmatpush.msra.mxu0 0.0
    %165 = vmatpush.msra.mxu0 0.0
    %166 = vmatpush.msra.mxu0 0.0
    %167 = vmatpush.msra.mxu0 0.0
    %168 = vmatpush.msra.mxu0 0.0
    %169 = vmatpush.msra.mxu0 0.0
    %170 = vmatpush.msra.mxu0 0.0
    %171 = vmatpush.msra.mxu0 %v122
    %172 = vmatpush.msra.mxu0 %v121
    %173 = vmatpush.msra.mxu0 %v120
    %174 = vmatpush.msra.mxu0 %v119
    %175 = vmatmul.f32.gmra.mxu0 %v157
    %v176 = vpop.f32.mrf.mxu0
    %v177 = vadd.f32 %v154, %v176
    %178 = vdwg.mxu0
    %v179 = vperm.slane %v140, 0
    %v181 = vsel %vm155, %v177, 0
    %183 = vmatpush.msra.mxu0 0.0
    %184 = vmatpush.msra.mxu0 0.0
    %185 = vmatpush.msra.mxu0 0.0
    %186 = vmatpush.msra.mxu0 0.0
    %187 = vmatpush.msra.mxu0 0.0
    %188 = vmatpush.msra.mxu0 0.0
    %189 = vmatpush.msra.mxu0 0.0
    %190 = vmatpush.msra.mxu0 0.0
    %191 = vmatpush.msra.mxu0 0.0
    %192 = vmatpush.msra.mxu0 0.0
    %193 = vmatpush.msra.mxu0 0.0
    %194 = vmatpush.msra.mxu0 0.0
    %195 = vmatpush.msra.mxu0 %v126
    %196 = vmatpush.msra.mxu0 %v125
    %197 = vmatpush.msra.mxu0 %v124
    %198 = vmatpush.msra.mxu0 %v123
    %199 = vmatmul.f32.gmra.mxu0 %v181
    %v200 = vpop.f32.mrf.mxu0
    %v201 = vadd.f32 %v179, %v200
    %202 = vdwg.mxu0
    %v203 = vmax.f32 %v201, 0.0
    %v204 = vadd.f32 %v177, %v203
    %v205 = vperm.slane %v141, 0
    %v207 = vsel %vm155, %v204, 0
    %209 = vmatpush.msra.mxu0 0.0
    %210 = vmatpush.msra.mxu0 0.0
    %211 = vmatpush.msra.mxu0 0.0
    %212 = vmatpush.msra.mxu0 0.0
    %213 = vmatpush.msra.mxu0 0.0
    %214 = vmatpush.msra.mxu0 0.0
    %215 = vmatpush.msra.mxu0 0.0
    %216 = vmatpush.msra.mxu0 0.0
    %217 = vmatpush.msra.mxu0 0.0
    %218 = vmatpush.msra.mxu0 0.0
    %219 = vmatpush.msra.mxu0 0.0
    %220 = vmatpush.msra.mxu0 0.0
    %221 = vmatpush.msra.mxu0 %v130
    %222 = vmatpush.msra.mxu0 %v129
    %223 = vmatpush.msra.mxu0 %v128
    %224 = vmatpush.msra.mxu0 %v127
    %225 = vmatmul.f32.gmra.mxu0 %v207
    %v226 = vpop.f32.mrf.mxu0
    %v227 = vadd.f32 %v205, %v226
    %228 = vdwg.mxu0
    %v229 = vmax.f32 %v227, 0.0
    %v230 = vperm.slane %v142, 0
    %v232 = vsel %vm155, %v229, 0
    %234 = vmatpush.msra.mxu0 0.0
    %235 = vmatpush.msra.mxu0 0.0
    %236 = vmatpush.msra.mxu0 0.0
    %237 = vmatpush.msra.mxu0 0.0
    %238 = vmatpush.msra.mxu0 0.0
    %239 = vmatpush.msra.mxu0 0.0
    %240 = vmatpush.msra.mxu0 0.0
    %241 = vmatpush.msra.mxu0 0.0
    %242 = vmatpush.msra.mxu0 0.0
    %243 = vmatpush.msra.mxu0 0.0
    %244 = vmatpush.msra.mxu0 0.0
    %245 = vmatpush.msra.mxu0 0.0
    %246 = vmatpush.msra.mxu0 %v134
    %247 = vmatpush.msra.mxu0 %v133
    %248 = vmatpush.msra.mxu0 %v132
    %249 = vmatpush.msra.mxu0 %v131
    %250 = vmatmul.f32.gmra.mxu0 %v232
    %v251 = vpop.f32.mrf.mxu0
    %v252 = vadd.f32 %v230, %v251
    %253 = vdwg.mxu0
    %v254 = vperm.slane %v143, 0
    %v256 = vsel %vm155, %v252, 0
    %258 = vmatpush.msra.mxu0 0.0
    %259 = vmatpush.msra.mxu0 0.0
    %260 = vmatpush.msra.mxu0 0.0
    %261 = vmatpush.msra.mxu0 0.0
    %262 = vmatpush.msra.mxu0 0.0
    %263 = vmatpush.msra.mxu0 0.0
    %264 = vmatpush.msra.mxu0 0.0
    %265 = vmatpush.msra.mxu0 0.0
    %266 = vmatpush.msra.mxu0 0.0
    %267 = vmatpush.msra.mxu0 0.0
    %268 = vmatpush.msra.mxu0 0.0
    %269 = vmatpush.msra.mxu0 0.0
    %270 = vmatpush.msra.mxu0 %v138
    %271 = vmatpush.msra.mxu0 %v137
    %272 = vmatpush.msra.mxu0 %v136
    %273 = vmatpush.msra.mxu0 %v135
    %274 = vmatmul.f32.gmra.mxu0 %v256
    %v275 = vpop.f32.mrf.mxu0
    %v276 = vadd.f32 %v254, %v275
    %277 = vdwg.mxu0
    %v278 = vmax.f32 %v276, 0.0
    %v279 = vadd.f32 %v252, %v278
    %v280 = vperm.slane %v144, 0
    %v281 = vmul.f32 %v279, %v280
    %v282 = vsel %vm155, %v281, 0.0
    %283 = vadd.xlane.f32.xlu0 %v282
    %v284 = vpop.xlane.xlu0 %283
    %v285 = vperm.slane %v145, 0
    %v286 = vadd.f32 %v284, %v285
    %288 = vset.pattern.permute.xlu0 0
    %289 = vperm.xlu0 %288, %v286
    %v290 = vpop.permute.xlu0 %289
    %292 = vst [vmem:[#allocation2] sm:$0xff] %v290
    // Predicated region
    $region14: #{tpu_custom_call.1} parent=1 // pred_check
      _
    $region15: #{tpu_custom_call.1} parent=1 // pred_check_branch
      %294 = sbr.rel (0) target = $region17
    $region16: #{tpu_custom_call.1} parent=1 // pred_region
      %296 = vsyncadd [#allocation3], 0
      %s298 = sshll.u32 [#allocation2], 4
      %s299 = int_to_ptr.vmem [resolvable:$true] %s298
      %s300 = sshll.u32 %s3, 4
      %s301 = int_to_ptr.hbm [resolvable:$true] %s300
      %303 = dma.vmem_to_hbm [thread:$0]  %s299, 128, %s301, [#allocation3]
    $region17: #{tpu_custom_call.1} parent=1 // pred_fallthru
      _
    // Predicated region
    $region18: #{tpu_custom_call.1} parent=1 // pred_check
      _
    $region19: #{tpu_custom_call.1} parent=1 // pred_check_branch
      %305 = sbr.rel (0) target = $region21
    $region20: #{tpu_custom_call.1} parent=1 // pred_region
      %307 = dma.done [#allocation3], 128
    $region21: #{tpu_custom_call.1} parent=1 // pred_fallthru
      _
    %308 = vsyncpa [#allocation3], 1

</llo_original>
